<compile_context>
chip_gen: v7x
topology: tpu7x:2x2x1
jax: 0.10.0
libtpu: 0.0.40
codegen_flags: <defaults>
</compile_context>

<pallas_src>
import jax
import jax.numpy as jnp
from jax import lax
from jax.experimental import pallas as pl
from jax.experimental.pallas import tpu as pltpu

# ------------------------- Config -------------------------
BATSIZE = 2      # Config.batsize
NSERIES = 8      # Config.nseries == sequence length
NINPUT  = 4      # Config.ninput
NHIDD   = 32     # Config.nhidd
NLAYERS = 1      # Config.nlayers
NOUT    = 1      # Config.nout


def _round8(n):
    return ((n + 7) // 8) * 8


def _packed_offsets(din, h, nout):
    """Row offsets of each parameter section inside the packed (rows, 4H) slab.

    Sections are aligned to 8-row (sublane-tile) boundaries so the in-kernel
    static slices are tile-aligned loads.
    """
    o_wih = 0
    o_whh = _round8(din)
    o_bias = o_whh + _round8(h)
    o_wfc = o_bias + 8
    o_bfc = o_wfc + _round8(nout)
    rows = o_bfc + 8
    return o_wih, o_whh, o_bias, o_wfc, o_bfc, rows


# ------------------------- Pallas kernel -------------------------
def lstm_attn_fc_kernel(x_ref,      # (T*B, Din) f32, row = t*B + b
                        p_ref,      # (rows, 4H) f32, packed (gate-scaled) params
                        out_ref):   # (B, nout)  f32
    TB, Din = x_ref.shape
    B, nout = out_ref.shape
    T = TB // B
    H4 = p_ref.shape[1]
    H = H4 // 4
    o_wih, o_whh, o_bias, o_wfc, o_bfc, _ = _packed_offsets(Din, H, nout)

    # Static, tile-aligned slices of the single packed parameter slab.
    # NOTE: i|f|o gate columns of wih/whh/bias are pre-scaled by 0.5 at pack
    # time (sigmoid-via-tanh trick); the g gate columns are unscaled.
    wih = p_ref[o_wih:o_wih + Din, :]                 # (Din, 4H)   W_ih^T (scaled)
    whh = p_ref[o_whh:o_whh + H, :]                   # (H, 4H)     W_hh^T (scaled)
    bias = p_ref[o_bias:o_bias + 1, :]                # (1, 4H)     b_ih+b_hh (scaled)
    wfc = p_ref[o_wfc:o_wfc + nout, 0:H]              # (nout, H)   W_fc rows
    bfc = p_ref[o_bfc:o_bfc + 1, 0:nout]              # (1, nout)

    # Hoisted input projection + fused bias: one MXU push for all T steps.
    xg = jnp.dot(x_ref[...], wih,
                 preferred_element_type=jnp.float32) + bias    # (T*B, 4H)

    # Lane mask selecting the cell ("g") gate block [2H, 3H) of PyTorch's
    # i|f|g|o gate layout, plus hoisted fixup constants:
    #   g lanes:   act = tanh(pre)
    #   i/f/o lanes: act = 0.5*tanh(pre/2) + 0.5  (== sigmoid(pre); the /2 is
    #   already baked into the packed weights, so only the *0.5+0.5 remains).
    lane = lax.broadcasted_iota(jnp.int32, (B, H4), 1)
    g_mask = (lane >= 2 * H) & (lane < 3 * H)
    post_mul = jnp.where(g_mask, 1.0, 0.5).astype(jnp.float32)  # (B, 4H)
    post_add = jnp.where(g_mask, 0.0, 0.5).astype(jnp.float32)  # (B, 4H)

    # Recurrence (init_hidden(): zeros). T is static & tiny -> full unroll.
    h = jnp.zeros((B, H), jnp.float32)
    c = jnp.zeros((B, H), jnp.float32)
    hs = []
    for t in range(T):
        gates = xg[t * B:(t + 1) * B, :] + jnp.dot(
            h, whh, preferred_element_type=jnp.float32)        # (B, 4H), pre-scaled
        tg = jnp.tanh(gates)                                   # ONE EUP push / step
        act = tg * post_mul + post_add                         # gate fixup (VPU)
        i_g = act[:, 0:H]
        f_g = act[:, H:2 * H]
        g_g = act[:, 2 * H:3 * H]
        o_g = act[:, 3 * H:4 * H]
        c = f_g * c + i_g * g_g
        h = o_g * jnp.tanh(c)
        hs.append(h)

    # ---- Attention epilogue (vectorized across time) ----
    # score[b, t] = tanh(<h_tb, h_tb>); softmax over t per batch element b.
    sq = [jnp.sum(ht * ht, axis=-1, keepdims=True) for ht in hs]   # T x (B,1)
    scores = jnp.concatenate(sq, axis=-1)                          # (B, T)
    st = jnp.tanh(scores)                                          # one tanh
    m = jnp.max(st, axis=-1, keepdims=True)                        # one lane reduce
    e = jnp.exp(st - m)                                            # one exp
    denom = jnp.sum(e, axis=-1, keepdims=True)                     # (B, 1)

    # Unnormalized context: weighted sum of the hidden states (FMA chain).
    ctxu = e[:, 0:1] * hs[0]
    for t in range(1, T):
        ctxu = ctxu + e[:, t:t + 1] * hs[t]                        # (B, H)

    # Fused linear head with the softmax normalization folded in:
    #   out = (ctxu @ W_fc^T) / denom + b_fc
    if nout == 1:
        head = jnp.sum(ctxu * wfc[0:1, :], axis=-1, keepdims=True)   # (B, 1)
    else:
        head = lax.dot_general(ctxu, wfc, (((1,), (1,)), ((), ())),
                               preferred_element_type=jnp.float32)   # (B, nout)
    out_ref[...] = head * pl.reciprocal(denom, approx=True) + bfc


# ------------------------- one-time parameter packing -------------------------
def pack_params(params):
    """Pack all parameters into one f32 slab -> single HBM->VMEM DMA.

    Also bakes the 0.5 pre-scale of the i|f|o gate columns (sigmoid-via-tanh)
    into W_ih, W_hh and the fused bias. Call ONCE at init, not per forward.
    """
    w_ih, w_hh, b_ih, b_hh, w_fc, b_fc = params
    H = w_hh.shape[1]
    Din = w_ih.shape[1]
    nout = w_fc.shape[0]

    # i|f|g|o gate layout: scale i, f, o columns by 0.5; leave g at 1.0.
    gate_scale = jnp.concatenate([
        jnp.full((2 * H,), 0.5, jnp.float32),
        jnp.ones((H,), jnp.float32),
        jnp.full((H,), 0.5, jnp.float32),
    ])                                                            # (4H,)

    o_wih, o_whh, o_bias, o_wfc, o_bfc, rows = _packed_offsets(Din, H, nout)
    packed = jnp.zeros((rows, 4 * H), jnp.float32)
    packed = packed.at[o_wih:o_wih + Din, :].set(w_ih.T * gate_scale)   # (Din, 4H)
    packed = packed.at[o_whh:o_whh + H, :].set(w_hh.T * gate_scale)     # (H, 4H)
    packed = packed.at[o_bias, :].set((b_ih + b_hh) * gate_scale)       # (4H,)
    packed = packed.at[o_wfc:o_wfc + nout, 0:H].set(w_fc)               # (nout, H)
    packed = packed.at[o_bfc, 0:nout].set(b_fc)                         # (nout,)
    return packed


# ------------------------- forward wrapper (jitted) -------------------------
def _forward(x, packed):
    """x: (batch, seq, ninput) f32, batch_first like the PyTorch module.
    packed: cached (rows, 4H) f32 slab from pack_params()."""
    B, T, Din = x.shape
    nout = NOUT

    # (B, T, Din) -> (T*B, Din), row = t*B + b (time-major for the unrolled loop).
    x2d = jnp.transpose(x, (1, 0, 2)).reshape(T * B, Din)

    vmem = pl.BlockSpec(memory_space=pltpu.MemorySpace.VMEM)
    return pl.pallas_call(
        lstm_attn_fc_kernel,
        out_shape=jax.ShapeDtypeStruct((B, nout), jnp.float32),
        in_specs=[vmem, vmem],
        out_specs=vmem,
    )(x2d, packed)


lstm_regr_forward = jax.jit(_forward)


# ------------------------- pure-JAX reference -------------------------
def reference_forward(x, params):
    w_ih, w_hh, b_ih, b_hh, w_fc, b_fc = params
    B, T, Din = x.shape
    H = w_hh.shape[1]
    h = jnp.zeros((B, H), jnp.float32)
    c = jnp.zeros((B, H), jnp.float32)
    outs = []
    for t in range(T):
        gates = x[:, t, :] @ w_ih.T + b_ih + h @ w_hh.T + b_hh
        i_g, f_g, g_g, o_g = jnp.split(gates, 4, axis=1)
        i_g = jax.nn.sigmoid(i_g)
        f_g = jax.nn.sigmoid(f_g)
        g_g = jnp.tanh(g_g)
        o_g = jax.nn.sigmoid(o_g)
        c = f_g * c + i_g * g_g
        h = o_g * jnp.tanh(c)
        outs.append(h)
    lstm_out = jnp.stack(outs, axis=1)                        # (B, T, H)
    scores = jnp.tanh(jnp.sum(lstm_out * lstm_out, axis=-1))  # (B, T)
    attn = jax.nn.softmax(scores, axis=1)
    ctx = jnp.einsum('bt,bth->bh', attn, lstm_out)
    return ctx @ w_fc.T + b_fc


# ------------------------- deterministic params -------------------------
def init_params(key):
    k = 1.0 / jnp.sqrt(jnp.float32(NHIDD))
    ks = jax.random.split(key, 5)
    w_ih = jax.random.uniform(ks[0], (4 * NHIDD, NINPUT), jnp.float32, -k, k)
    w_hh = jax.random.uniform(ks[1], (4 * NHIDD, NHIDD), jnp.float32, -k, k)
    b_ih = jax.random.uniform(ks[2], (4 * NHIDD,), jnp.float32, -k, k)
    b_hh = jax.random.uniform(ks[3], (4 * NHIDD,), jnp.float32, -k, k)
    # fullc: weight.uniform_(-0.01, 0.01), bias.fill_(0)  (init_weight())
    w_fc = jax.random.uniform(ks[4], (NOUT, NHIDD), jnp.float32, -0.01, 0.01)
    b_fc = jnp.zeros((NOUT,), jnp.float32)
    return (w_ih, w_hh, b_ih, b_hh, w_fc, b_fc)


if __name__ == "__main__":
    key = jax.random.PRNGKey(0)
    k_params, k_x = jax.random.split(key)
    params = init_params(k_params)
    x = jax.random.normal(k_x, (BATSIZE, NSERIES, NINPUT), jnp.float32)

    # One-time parameter packing (hoisted out of the per-call path).
    packed = jax.block_until_ready(pack_params(params))

    out = lstm_regr_forward(x, packed)
    out = jax.block_until_ready(out)

    ref = reference_forward(x, params)
    assert out.shape == (BATSIZE, NOUT)
    assert jnp.allclose(out, ref, atol=1e-3, rtol=1e-3), (
        f"mismatch: max abs diff {jnp.max(jnp.abs(out - ref))}")
    print("KERNEL_OK")
</pallas_src>

<mosaic_0001>
module attributes {stable_mosaic.version = 11 : i64} {
  func.func @lstm_attn_fc_kernel(%arg0: memref<16x4xf32, #tpu.memory_space<vmem>>, %arg1: memref<64x128xf32, #tpu.memory_space<vmem>>, %arg2: memref<2x1xf32, #tpu.memory_space<vmem>>) attributes {dimension_semantics = [], scalar_prefetch = 0 : i64, scratch_operands = 0 : i64, tpu.core_type = #tpu.core_type<tc>} {
    %c0 = arith.constant 0 : index
    %c0_0 = arith.constant 0 : index
    %0 = vector.load %arg1[%c0, %c0_0] : memref<64x128xf32, #tpu.memory_space<vmem>>, vector<4x128xf32>
    %c8 = arith.constant 8 : index
    %c0_1 = arith.constant 0 : index
    %1 = vector.load %arg1[%c8, %c0_1] : memref<64x128xf32, #tpu.memory_space<vmem>>, vector<32x128xf32>
    %c40 = arith.constant 40 : index
    %c0_2 = arith.constant 0 : index
    %2 = vector.load %arg1[%c40, %c0_2] : memref<64x128xf32, #tpu.memory_space<vmem>>, vector<1x128xf32>
    %c48 = arith.constant 48 : index
    %c0_3 = arith.constant 0 : index
    %3 = vector.load %arg1[%c48, %c0_3] : memref<64x128xf32, #tpu.memory_space<vmem>>, vector<1x32xf32>
    %c56 = arith.constant 56 : index
    %c0_4 = arith.constant 0 : index
    %4 = vector.load %arg1[%c56, %c0_4] : memref<64x128xf32, #tpu.memory_space<vmem>>, vector<1x1xf32>
    %c0_5 = arith.constant 0 : index
    %c0_6 = arith.constant 0 : index
    %5 = vector.load %arg0[%c0_5, %c0_6] : memref<16x4xf32, #tpu.memory_space<vmem>>, vector<16x4xf32>
    %cst = arith.constant dense<0.000000e+00> : vector<16x128xf32>
    %6 = tpu.matmul %5, %0, %cst {dimension_numbers = #tpu.dot_dimension_numbers<[1], [0], [0], [1], [0, 0, 1, 1], [], []>} : vector<16x4xf32>, vector<4x128xf32>, vector<16x128xf32> -> vector<16x128xf32>
    %7 = vector.broadcast %2 : vector<1x128xf32> to vector<16x128xf32>
    %8 = arith.addf %6, %7 : vector<16x128xf32>
    %9 = tpu.iota {dimensions = array<i32: 1>} : vector<2x128xi32>
    %c64_i32 = arith.constant 64 : i32
    %10 = vector.broadcast %c64_i32 : i32 to vector<2x128xi32>
    %11 = arith.cmpi sge, %9, %10 : vector<2x128xi32>
    %c96_i32 = arith.constant 96 : i32
    %12 = vector.broadcast %c96_i32 : i32 to vector<2x128xi32>
    %13 = arith.cmpi slt, %9, %12 : vector<2x128xi32>
    %14 = arith.andi %11, %13 : vector<2x128xi1>
    %cst_7 = arith.constant 1.000000e+00 : f32
    %cst_8 = arith.constant 5.000000e-01 : f32
    %15 = vector.broadcast %cst_7 : f32 to vector<2x128xf32>
    %16 = vector.broadcast %cst_8 : f32 to vector<2x128xf32>
    %17 = arith.select %14, %15, %16 : vector<2x128xi1>, vector<2x128xf32>
    %cst_9 = arith.constant 0.000000e+00 : f32
    %cst_10 = arith.constant 5.000000e-01 : f32
    %18 = vector.broadcast %cst_9 : f32 to vector<2x128xf32>
    %19 = vector.broadcast %cst_10 : f32 to vector<2x128xf32>
    %20 = arith.select %14, %18, %19 : vector<2x128xi1>, vector<2x128xf32>
    %cst_11 = arith.constant 0.000000e+00 : f32
    %21 = vector.broadcast %cst_11 : f32 to vector<2x32xf32>
    %cst_12 = arith.constant 0.000000e+00 : f32
    %22 = vector.broadcast %cst_12 : f32 to vector<2x32xf32>
    %23 = vector.extract_strided_slice %8 {offsets = [0, 0], sizes = [2, 128], strides = [1, 1]} : vector<16x128xf32> to vector<2x128xf32>
    %cst_13 = arith.constant dense<0.000000e+00> : vector<2x128xf32>
    %24 = tpu.matmul %21, %1, %cst_13 {dimension_numbers = #tpu.dot_dimension_numbers<[1], [0], [0], [1], [0, 0, 1, 1], [], []>} : vector<2x32xf32>, vector<32x128xf32>, vector<2x128xf32> -> vector<2x128xf32>
    %25 = arith.addf %23, %24 : vector<2x128xf32>
    %26 = math.tanh %25 : vector<2x128xf32>
    %27 = arith.mulf %26, %17 : vector<2x128xf32>
    %28 = arith.addf %27, %20 : vector<2x128xf32>
    %29 = vector.extract_strided_slice %28 {offsets = [0, 0], sizes = [2, 32], strides = [1, 1]} : vector<2x128xf32> to vector<2x32xf32>
    %30 = vector.extract_strided_slice %28 {offsets = [0, 32], sizes = [2, 32], strides = [1, 1]} : vector<2x128xf32> to vector<2x32xf32>
    %31 = vector.extract_strided_slice %28 {offsets = [0, 64], sizes = [2, 32], strides = [1, 1]} : vector<2x128xf32> to vector<2x32xf32>
    %32 = vector.extract_strided_slice %28 {offsets = [0, 96], sizes = [2, 32], strides = [1, 1]} : vector<2x128xf32> to vector<2x32xf32>
    %33 = arith.mulf %30, %22 : vector<2x32xf32>
    %34 = arith.mulf %29, %31 : vector<2x32xf32>
    %35 = arith.addf %33, %34 : vector<2x32xf32>
    %36 = math.tanh %35 : vector<2x32xf32>
    %37 = arith.mulf %32, %36 : vector<2x32xf32>
    %38 = vector.extract_strided_slice %8 {offsets = [2, 0], sizes = [2, 128], strides = [1, 1]} : vector<16x128xf32> to vector<2x128xf32>
    %cst_14 = arith.constant dense<0.000000e+00> : vector<2x128xf32>
    %39 = tpu.matmul %37, %1, %cst_14 {dimension_numbers = #tpu.dot_dimension_numbers<[1], [0], [0], [1], [0, 0, 1, 1], [], []>} : vector<2x32xf32>, vector<32x128xf32>, vector<2x128xf32> -> vector<2x128xf32>
    %40 = arith.addf %38, %39 : vector<2x128xf32>
    %41 = math.tanh %40 : vector<2x128xf32>
    %42 = arith.mulf %41, %17 : vector<2x128xf32>
    %43 = arith.addf %42, %20 : vector<2x128xf32>
    %44 = vector.extract_strided_slice %43 {offsets = [0, 0], sizes = [2, 32], strides = [1, 1]} : vector<2x128xf32> to vector<2x32xf32>
    %45 = vector.extract_strided_slice %43 {offsets = [0, 32], sizes = [2, 32], strides = [1, 1]} : vector<2x128xf32> to vector<2x32xf32>
    %46 = vector.extract_strided_slice %43 {offsets = [0, 64], sizes = [2, 32], strides = [1, 1]} : vector<2x128xf32> to vector<2x32xf32>
    %47 = vector.extract_strided_slice %43 {offsets = [0, 96], sizes = [2, 32], strides = [1, 1]} : vector<2x128xf32> to vector<2x32xf32>
    %48 = arith.mulf %45, %35 : vector<2x32xf32>
    %49 = arith.mulf %44, %46 : vector<2x32xf32>
    %50 = arith.addf %48, %49 : vector<2x32xf32>
    %51 = math.tanh %50 : vector<2x32xf32>
    %52 = arith.mulf %47, %51 : vector<2x32xf32>
    %53 = vector.extract_strided_slice %8 {offsets = [4, 0], sizes = [2, 128], strides = [1, 1]} : vector<16x128xf32> to vector<2x128xf32>
    %cst_15 = arith.constant dense<0.000000e+00> : vector<2x128xf32>
    %54 = tpu.matmul %52, %1, %cst_15 {dimension_numbers = #tpu.dot_dimension_numbers<[1], [0], [0], [1], [0, 0, 1, 1], [], []>} : vector<2x32xf32>, vector<32x128xf32>, vector<2x128xf32> -> vector<2x128xf32>
    %55 = arith.addf %53, %54 : vector<2x128xf32>
    %56 = math.tanh %55 : vector<2x128xf32>
    %57 = arith.mulf %56, %17 : vector<2x128xf32>
    %58 = arith.addf %57, %20 : vector<2x128xf32>
    %59 = vector.extract_strided_slice %58 {offsets = [0, 0], sizes = [2, 32], strides = [1, 1]} : vector<2x128xf32> to vector<2x32xf32>
    %60 = vector.extract_strided_slice %58 {offsets = [0, 32], sizes = [2, 32], strides = [1, 1]} : vector<2x128xf32> to vector<2x32xf32>
    %61 = vector.extract_strided_slice %58 {offsets = [0, 64], sizes = [2, 32], strides = [1, 1]} : vector<2x128xf32> to vector<2x32xf32>
    %62 = vector.extract_strided_slice %58 {offsets = [0, 96], sizes = [2, 32], strides = [1, 1]} : vector<2x128xf32> to vector<2x32xf32>
    %63 = arith.mulf %60, %50 : vector<2x32xf32>
    %64 = arith.mulf %59, %61 : vector<2x32xf32>
    %65 = arith.addf %63, %64 : vector<2x32xf32>
    %66 = math.tanh %65 : vector<2x32xf32>
    %67 = arith.mulf %62, %66 : vector<2x32xf32>
    %68 = vector.extract_strided_slice %8 {offsets = [6, 0], sizes = [2, 128], strides = [1, 1]} : vector<16x128xf32> to vector<2x128xf32>
    %cst_16 = arith.constant dense<0.000000e+00> : vector<2x128xf32>
    %69 = tpu.matmul %67, %1, %cst_16 {dimension_numbers = #tpu.dot_dimension_numbers<[1], [0], [0], [1], [0, 0, 1, 1], [], []>} : vector<2x32xf32>, vector<32x128xf32>, vector<2x128xf32> -> vector<2x128xf32>
    %70 = arith.addf %68, %69 : vector<2x128xf32>
    %71 = math.tanh %70 : vector<2x128xf32>
    %72 = arith.mulf %71, %17 : vector<2x128xf32>
    %73 = arith.addf %72, %20 : vector<2x128xf32>
    %74 = vector.extract_strided_slice %73 {offsets = [0, 0], sizes = [2, 32], strides = [1, 1]} : vector<2x128xf32> to vector<2x32xf32>
    %75 = vector.extract_strided_slice %73 {offsets = [0, 32], sizes = [2, 32], strides = [1, 1]} : vector<2x128xf32> to vector<2x32xf32>
    %76 = vector.extract_strided_slice %73 {offsets = [0, 64], sizes = [2, 32], strides = [1, 1]} : vector<2x128xf32> to vector<2x32xf32>
    %77 = vector.extract_strided_slice %73 {offsets = [0, 96], sizes = [2, 32], strides = [1, 1]} : vector<2x128xf32> to vector<2x32xf32>
    %78 = arith.mulf %75, %65 : vector<2x32xf32>
    %79 = arith.mulf %74, %76 : vector<2x32xf32>
    %80 = arith.addf %78, %79 : vector<2x32xf32>
    %81 = math.tanh %80 : vector<2x32xf32>
    %82 = arith.mulf %77, %81 : vector<2x32xf32>
    %83 = vector.extract_strided_slice %8 {offsets = [8, 0], sizes = [2, 128], strides = [1, 1]} : vector<16x128xf32> to vector<2x128xf32>
    %cst_17 = arith.constant dense<0.000000e+00> : vector<2x128xf32>
    %84 = tpu.matmul %82, %1, %cst_17 {dimension_numbers = #tpu.dot_dimension_numbers<[1], [0], [0], [1], [0, 0, 1, 1], [], []>} : vector<2x32xf32>, vector<32x128xf32>, vector<2x128xf32> -> vector<2x128xf32>
    %85 = arith.addf %83, %84 : vector<2x128xf32>
    %86 = math.tanh %85 : vector<2x128xf32>
    %87 = arith.mulf %86, %17 : vector<2x128xf32>
    %88 = arith.addf %87, %20 : vector<2x128xf32>
    %89 = vector.extract_strided_slice %88 {offsets = [0, 0], sizes = [2, 32], strides = [1, 1]} : vector<2x128xf32> to vector<2x32xf32>
    %90 = vector.extract_strided_slice %88 {offsets = [0, 32], sizes = [2, 32], strides = [1, 1]} : vector<2x128xf32> to vector<2x32xf32>
    %91 = vector.extract_strided_slice %88 {offsets = [0, 64], sizes = [2, 32], strides = [1, 1]} : vector<2x128xf32> to vector<2x32xf32>
    %92 = vector.extract_strided_slice %88 {offsets = [0, 96], sizes = [2, 32], strides = [1, 1]} : vector<2x128xf32> to vector<2x32xf32>
    %93 = arith.mulf %90, %80 : vector<2x32xf32>
    %94 = arith.mulf %89, %91 : vector<2x32xf32>
    %95 = arith.addf %93, %94 : vector<2x32xf32>
    %96 = math.tanh %95 : vector<2x32xf32>
    %97 = arith.mulf %92, %96 : vector<2x32xf32>
    %98 = vector.extract_strided_slice %8 {offsets = [10, 0], sizes = [2, 128], strides = [1, 1]} : vector<16x128xf32> to vector<2x128xf32>
    %cst_18 = arith.constant dense<0.000000e+00> : vector<2x128xf32>
    %99 = tpu.matmul %97, %1, %cst_18 {dimension_numbers = #tpu.dot_dimension_numbers<[1], [0], [0], [1], [0, 0, 1, 1], [], []>} : vector<2x32xf32>, vector<32x128xf32>, vector<2x128xf32> -> vector<2x128xf32>
    %100 = arith.addf %98, %99 : vector<2x128xf32>
    %101 = math.tanh %100 : vector<2x128xf32>
    %102 = arith.mulf %101, %17 : vector<2x128xf32>
    %103 = arith.addf %102, %20 : vector<2x128xf32>
    %104 = vector.extract_strided_slice %103 {offsets = [0, 0], sizes = [2, 32], strides = [1, 1]} : vector<2x128xf32> to vector<2x32xf32>
    %105 = vector.extract_strided_slice %103 {offsets = [0, 32], sizes = [2, 32], strides = [1, 1]} : vector<2x128xf32> to vector<2x32xf32>
    %106 = vector.extract_strided_slice %103 {offsets = [0, 64], sizes = [2, 32], strides = [1, 1]} : vector<2x128xf32> to vector<2x32xf32>
    %107 = vector.extract_strided_slice %103 {offsets = [0, 96], sizes = [2, 32], strides = [1, 1]} : vector<2x128xf32> to vector<2x32xf32>
    %108 = arith.mulf %105, %95 : vector<2x32xf32>
    %109 = arith.mulf %104, %106 : vector<2x32xf32>
    %110 = arith.addf %108, %109 : vector<2x32xf32>
    %111 = math.tanh %110 : vector<2x32xf32>
    %112 = arith.mulf %107, %111 : vector<2x32xf32>
    %113 = vector.extract_strided_slice %8 {offsets = [12, 0], sizes = [2, 128], strides = [1, 1]} : vector<16x128xf32> to vector<2x128xf32>
    %cst_19 = arith.constant dense<0.000000e+00> : vector<2x128xf32>
    %114 = tpu.matmul %112, %1, %cst_19 {dimension_numbers = #tpu.dot_dimension_numbers<[1], [0], [0], [1], [0, 0, 1, 1], [], []>} : vector<2x32xf32>, vector<32x128xf32>, vector<2x128xf32> -> vector<2x128xf32>
    %115 = arith.addf %113, %114 : vector<2x128xf32>
    %116 = math.tanh %115 : vector<2x128xf32>
    %117 = arith.mulf %116, %17 : vector<2x128xf32>
    %118 = arith.addf %117, %20 : vector<2x128xf32>
    %119 = vector.extract_strided_slice %118 {offsets = [0, 0], sizes = [2, 32], strides = [1, 1]} : vector<2x128xf32> to vector<2x32xf32>
    %120 = vector.extract_strided_slice %118 {offsets = [0, 32], sizes = [2, 32], strides = [1, 1]} : vector<2x128xf32> to vector<2x32xf32>
    %121 = vector.extract_strided_slice %118 {offsets = [0, 64], sizes = [2, 32], strides = [1, 1]} : vector<2x128xf32> to vector<2x32xf32>
    %122 = vector.extract_strided_slice %118 {offsets = [0, 96], sizes = [2, 32], strides = [1, 1]} : vector<2x128xf32> to vector<2x32xf32>
    %123 = arith.mulf %120, %110 : vector<2x32xf32>
    %124 = arith.mulf %119, %121 : vector<2x32xf32>
    %125 = arith.addf %123, %124 : vector<2x32xf32>
    %126 = math.tanh %125 : vector<2x32xf32>
    %127 = arith.mulf %122, %126 : vector<2x32xf32>
    %128 = vector.extract_strided_slice %8 {offsets = [14, 0], sizes = [2, 128], strides = [1, 1]} : vector<16x128xf32> to vector<2x128xf32>
    %cst_20 = arith.constant dense<0.000000e+00> : vector<2x128xf32>
    %129 = tpu.matmul %127, %1, %cst_20 {dimension_numbers = #tpu.dot_dimension_numbers<[1], [0], [0], [1], [0, 0, 1, 1], [], []>} : vector<2x32xf32>, vector<32x128xf32>, vector<2x128xf32> -> vector<2x128xf32>
    %130 = arith.addf %128, %129 : vector<2x128xf32>
    %131 = math.tanh %130 : vector<2x128xf32>
    %132 = arith.mulf %131, %17 : vector<2x128xf32>
    %133 = arith.addf %132, %20 : vector<2x128xf32>
    %134 = vector.extract_strided_slice %133 {offsets = [0, 0], sizes = [2, 32], strides = [1, 1]} : vector<2x128xf32> to vector<2x32xf32>
    %135 = vector.extract_strided_slice %133 {offsets = [0, 32], sizes = [2, 32], strides = [1, 1]} : vector<2x128xf32> to vector<2x32xf32>
    %136 = vector.extract_strided_slice %133 {offsets = [0, 64], sizes = [2, 32], strides = [1, 1]} : vector<2x128xf32> to vector<2x32xf32>
    %137 = vector.extract_strided_slice %133 {offsets = [0, 96], sizes = [2, 32], strides = [1, 1]} : vector<2x128xf32> to vector<2x32xf32>
    %138 = arith.mulf %135, %125 : vector<2x32xf32>
    %139 = arith.mulf %134, %136 : vector<2x32xf32>
    %140 = arith.addf %138, %139 : vector<2x32xf32>
    %141 = math.tanh %140 : vector<2x32xf32>
    %142 = arith.mulf %137, %141 : vector<2x32xf32>
    %143 = arith.mulf %37, %37 : vector<2x32xf32>
    %cst_21 = arith.constant dense<0.000000e+00> : vector<2xf32>
    %144 = vector.multi_reduction <add>, %143, %cst_21 [1] : vector<2x32xf32> to vector<2xf32>
    %145 = vector.shape_cast %144 : vector<2xf32> to vector<2x1xf32>
    %146 = arith.mulf %52, %52 : vector<2x32xf32>
    %cst_22 = arith.constant dense<0.000000e+00> : vector<2xf32>
    %147 = vector.multi_reduction <add>, %146, %cst_22 [1] : vector<2x32xf32> to vector<2xf32>
    %148 = vector.shape_cast %147 : vector<2xf32> to vector<2x1xf32>
    %149 = arith.mulf %67, %67 : vector<2x32xf32>
    %cst_23 = arith.constant dense<0.000000e+00> : vector<2xf32>
    %150 = vector.multi_reduction <add>, %149, %cst_23 [1] : vector<2x32xf32> to vector<2xf32>
    %151 = vector.shape_cast %150 : vector<2xf32> to vector<2x1xf32>
    %152 = arith.mulf %82, %82 : vector<2x32xf32>
    %cst_24 = arith.constant dense<0.000000e+00> : vector<2xf32>
    %153 = vector.multi_reduction <add>, %152, %cst_24 [1] : vector<2x32xf32> to vector<2xf32>
    %154 = vector.shape_cast %153 : vector<2xf32> to vector<2x1xf32>
    %155 = arith.mulf %97, %97 : vector<2x32xf32>
    %cst_25 = arith.constant dense<0.000000e+00> : vector<2xf32>
    %156 = vector.multi_reduction <add>, %155, %cst_25 [1] : vector<2x32xf32> to vector<2xf32>
    %157 = vector.shape_cast %156 : vector<2xf32> to vector<2x1xf32>
    %158 = arith.mulf %112, %112 : vector<2x32xf32>
    %cst_26 = arith.constant dense<0.000000e+00> : vector<2xf32>
    %159 = vector.multi_reduction <add>, %158, %cst_26 [1] : vector<2x32xf32> to vector<2xf32>
    %160 = vector.shape_cast %159 : vector<2xf32> to vector<2x1xf32>
    %161 = arith.mulf %127, %127 : vector<2x32xf32>
    %cst_27 = arith.constant dense<0.000000e+00> : vector<2xf32>
    %162 = vector.multi_reduction <add>, %161, %cst_27 [1] : vector<2x32xf32> to vector<2xf32>
    %163 = vector.shape_cast %162 : vector<2xf32> to vector<2x1xf32>
    %164 = arith.mulf %142, %142 : vector<2x32xf32>
    %cst_28 = arith.constant dense<0.000000e+00> : vector<2xf32>
    %165 = vector.multi_reduction <add>, %164, %cst_28 [1] : vector<2x32xf32> to vector<2xf32>
    %166 = vector.shape_cast %165 : vector<2xf32> to vector<2x1xf32>
    %167 = tpu.concatenate %145, %148, %151, %154, %157, %160, %163, %166 in 1 : vector<2x1xf32>, vector<2x1xf32>, vector<2x1xf32>, vector<2x1xf32>, vector<2x1xf32>, vector<2x1xf32>, vector<2x1xf32>, vector<2x1xf32> -> vector<2x8xf32>
    %168 = math.tanh %167 : vector<2x8xf32>
    %cst_29 = arith.constant dense<0xFF800000> : vector<2xf32>
    %169 = vector.multi_reduction <maximumf>, %168, %cst_29 [1] : vector<2x8xf32> to vector<2xf32>
    %170 = vector.shape_cast %169 : vector<2xf32> to vector<2x1xf32>
    %171 = vector.broadcast %170 : vector<2x1xf32> to vector<2x8xf32>
    %172 = arith.subf %168, %171 : vector<2x8xf32>
    %173 = math.exp %172 : vector<2x8xf32>
    %cst_30 = arith.constant dense<0.000000e+00> : vector<2xf32>
    %174 = vector.multi_reduction <add>, %173, %cst_30 [1] : vector<2x8xf32> to vector<2xf32>
    %175 = vector.shape_cast %174 : vector<2xf32> to vector<2x1xf32>
    %176 = vector.extract_strided_slice %173 {offsets = [0, 0], sizes = [2, 1], strides = [1, 1]} : vector<2x8xf32> to vector<2x1xf32>
    %177 = vector.broadcast %176 : vector<2x1xf32> to vector<2x32xf32>
    %178 = arith.mulf %177, %37 : vector<2x32xf32>
    %179 = vector.extract_strided_slice %173 {offsets = [0, 1], sizes = [2, 1], strides = [1, 1]} : vector<2x8xf32> to vector<2x1xf32>
    %180 = vector.broadcast %179 : vector<2x1xf32> to vector<2x32xf32>
    %181 = arith.mulf %180, %52 : vector<2x32xf32>
    %182 = arith.addf %178, %181 : vector<2x32xf32>
    %183 = vector.extract_strided_slice %173 {offsets = [0, 2], sizes = [2, 1], strides = [1, 1]} : vector<2x8xf32> to vector<2x1xf32>
    %184 = vector.broadcast %183 : vector<2x1xf32> to vector<2x32xf32>
    %185 = arith.mulf %184, %67 : vector<2x32xf32>
    %186 = arith.addf %182, %185 : vector<2x32xf32>
    %187 = vector.extract_strided_slice %173 {offsets = [0, 3], sizes = [2, 1], strides = [1, 1]} : vector<2x8xf32> to vector<2x1xf32>
    %188 = vector.broadcast %187 : vector<2x1xf32> to vector<2x32xf32>
    %189 = arith.mulf %188, %82 : vector<2x32xf32>
    %190 = arith.addf %186, %189 : vector<2x32xf32>
    %191 = vector.extract_strided_slice %173 {offsets = [0, 4], sizes = [2, 1], strides = [1, 1]} : vector<2x8xf32> to vector<2x1xf32>
    %192 = vector.broadcast %191 : vector<2x1xf32> to vector<2x32xf32>
    %193 = arith.mulf %192, %97 : vector<2x32xf32>
    %194 = arith.addf %190, %193 : vector<2x32xf32>
    %195 = vector.extract_strided_slice %173 {offsets = [0, 5], sizes = [2, 1], strides = [1, 1]} : vector<2x8xf32> to vector<2x1xf32>
    %196 = vector.broadcast %195 : vector<2x1xf32> to vector<2x32xf32>
    %197 = arith.mulf %196, %112 : vector<2x32xf32>
    %198 = arith.addf %194, %197 : vector<2x32xf32>
    %199 = vector.extract_strided_slice %173 {offsets = [0, 6], sizes = [2, 1], strides = [1, 1]} : vector<2x8xf32> to vector<2x1xf32>
    %200 = vector.broadcast %199 : vector<2x1xf32> to vector<2x32xf32>
    %201 = arith.mulf %200, %127 : vector<2x32xf32>
    %202 = arith.addf %198, %201 : vector<2x32xf32>
    %203 = vector.extract_strided_slice %173 {offsets = [0, 7], sizes = [2, 1], strides = [1, 1]} : vector<2x8xf32> to vector<2x1xf32>
    %204 = vector.broadcast %203 : vector<2x1xf32> to vector<2x32xf32>
    %205 = arith.mulf %204, %142 : vector<2x32xf32>
    %206 = arith.addf %202, %205 : vector<2x32xf32>
    %207 = vector.broadcast %3 : vector<1x32xf32> to vector<2x32xf32>
    %208 = arith.mulf %206, %207 : vector<2x32xf32>
    %cst_31 = arith.constant dense<0.000000e+00> : vector<2xf32>
    %209 = vector.multi_reduction <add>, %208, %cst_31 [1] : vector<2x32xf32> to vector<2xf32>
    %210 = vector.shape_cast %209 : vector<2xf32> to vector<2x1xf32>
    %211 = tpu.reciprocal %175 {approx = true} : vector<2x1xf32> -> vector<2x1xf32>
    %212 = arith.mulf %210, %211 : vector<2x1xf32>
    %213 = vector.broadcast %4 : vector<1x1xf32> to vector<2x1xf32>
    %214 = arith.addf %212, %213 : vector<2x1xf32>
    %c0_32 = arith.constant 0 : index
    %c0_33 = arith.constant 0 : index
    %215 = vector.load %arg2[%c0_32, %c0_33] : memref<2x1xf32, #tpu.memory_space<vmem>>, vector<2x1xf32>
    tpu.vector_store %arg2[%c0_32, %c0_33], %214 {strides = array<i32>} : memref<2x1xf32, #tpu.memory_space<vmem>>, vector<2x1xf32>,
    return
  }
}

</mosaic_0001>

<llo_original>
// kernel: _forward.1
$region0: #{_forward.1}
  #allocation0 [shape = 'u32[]', space=smem, size = 0x4, offset = 0x4, fixed_abs, tag = 'smem constant byte address 0x4 - core index']
  #allocation1 [shape = 'u32[144,128]{1,0:T(1,128)}', space=vmem, size = 0x12000, scoped, tag = 'internal scratch']
  %s0 = inlined_call_operand.vmem [shape: f32[16,4], index: 0, kind: input, shape index: {}]
  %s1 = inlined_call_operand.hbm [shape: f32[64,128], index: 1, kind: input, shape index: {}]
  %s2 = inlined_call_operand.vmem [shape: f32[2,1], index: 2, kind: output, shape index: {}]
  %s3 = sld [smem:[#allocation0]]
  $region22: #{_forward.1} parent=0
    _
  %s5 = ssub.s32 1, %s3
  %s6 = scalar_select 0, %s5, %s3
  $region1: #{_forward.1} parent=0
    #allocation2 [shape = 'u8[32768]{0}', space=vmem, size = 0x8000, scoped, tag = 'input window, operand 1, single buffered']
    #allocation3 [shape = 's32[1]{0}', space=sflag, size = 0x4, scoped, tag = 'scoped memory for _forward.1']
    %7 = vsyncpa [#allocation3], 0
    // Predicated region
    $region2: #{_forward.1} parent=1 // pred_check
      _
    $region3: #{_forward.1} parent=1 // pred_check_branch
      %9 = sbr.rel (0) target = $region5
    $region4: #{_forward.1} parent=1 // pred_region
      _
    $region5: #{_forward.1} parent=1 // pred_fallthru
      _
    // Predicated region
    $region6: #{_forward.1} parent=1 // pred_check
      _
    $region7: #{_forward.1} parent=1 // pred_check_branch
      %11 = sbr.rel (0) target = $region9
    $region8: #{_forward.1} parent=1 // pred_region
      %s13 = ssub.s32 1024, 1024
      %14 = vsyncadd [#allocation3], %s13
      %s15 = sshll.u32 [#allocation2], 4
      %s16 = int_to_ptr.vmem [resolvable:$true] %s15
      %21 = dma.hbm_to_vmem [thread:$0]  %s1, 1024, %s16, [#allocation3], 128, 128, 8
    $region9: #{_forward.1} parent=1 // pred_fallthru
      _
    // Predicated region
    $region10: #{_forward.1} parent=1 // pred_check
      _
    $region11: #{_forward.1} parent=1 // pred_check_branch
      %23 = sbr.rel (0) target = $region13
    $region12: #{_forward.1} parent=1 // pred_region
      %24 = dma.done [#allocation3], 1024
    $region13: #{_forward.1} parent=1 // pred_fallthru
      _
    %v25 = vld [vmem:[#allocation2] sm:$0xf]
    %v26 = vld [vmem:[#allocation2 + $0x8] sm:$0xff]
    %v27 = vld [vmem:[#allocation2 + $0x10] sm:$0xff]
    %v28 = vld [vmem:[#allocation2 + $0x18] sm:$0xff]
    %v29 = vld [vmem:[#allocation2 + $0x20] sm:$0xff]
    %v30 = vld [vmem:[#allocation2 + $0x28] sm:$0x1]
    %v31 = vld [vmem:[#allocation2 + $0x30] sm:$0x1]
    %v32 = vld [vmem:[#allocation2 + $0x38] sm:$0x1]
    %v33 = vld [vmem:[%s0] sm:$0xff]
    %v34 = vld [vmem:[%s0 + $0x8] sm:$0xff]
    %v35 = vlaneseq
    %v36 = vshrl.u32 %v35, 7
    %v37 = vsub.s32 0, %v36
    %v38 = vrot.slane %v30, %v37
    %vm39 = vcmask 31744
    %v41 = vsel %vm39, %v33, 0
    %v44 = vsel %vm39, %v34, 0
    %vm46 = vcmask 1043456
    %v48 = vsel %vm46, %v25, 0
    %50 = vmatprep.subr.mxu0 0.0
    %51 = vmatpush1.msra.mxu0 %v48
    %52 = vmatprep.subr.mxu0 0.0
    %53 = vmatpush1.msra.mxu0 0.0
    %54 = vmatprep.subr.mxu0 0.0
    %55 = vmatpush1.msra.mxu0 0.0
    %56 = vmatprep.subr.mxu0 0.0
    %57 = vmatpush1.msra.mxu0 0.0
    %58 = vmatprep.subr.mxu0 0.0
    %59 = vmatpush1.msra.mxu0 0.0
    %60 = vmatprep.subr.mxu0 0.0
    %61 = vmatpush1.msra.mxu0 0.0
    %62 = vmatprep.subr.mxu0 0.0
    %63 = vmatpush1.msra.mxu0 0.0
    %64 = vmatprep.subr.mxu0 0.0
    %65 = vmatpush1.msra.mxu0 0.0
    %66 = vmatprep.subr.mxu0 0.0
    %67 = vmatpush1.msra.mxu0 0.0
    %68 = vmatprep.subr.mxu0 0.0
    %69 = vmatpush1.msra.mxu0 0.0
    %70 = vmatprep.subr.mxu0 0.0
    %71 = vmatpush1.msra.mxu0 0.0
    %72 = vmatprep.subr.mxu0 0.0
    %73 = vmatpush1.msra.mxu0 0.0
    %74 = vmatprep.subr.mxu0 0.0
    %75 = vmatpush1.msra.mxu0 0.0
    %76 = vmatprep.subr.mxu0 0.0
    %77 = vmatpush1.msra.mxu0 0.0
    %78 = vmatprep.subr.mxu0 0.0
    %79 = vmatpush1.msra.mxu0 0.0
    %80 = vmatprep.subr.mxu0 0.0
    %81 = vmatpush1.msra.mxu0 0.0
    %82 = vmatprep.subr.mxu0 0.0
    %83 = vmatpush1.msra.mxu0 0.0
    %84 = vmatprep.subr.mxu0 0.0
    %85 = vmatpush1.msra.mxu0 0.0
    %86 = vmatprep.subr.mxu0 0.0
    %87 = vmatpush1.msra.mxu0 0.0
    %88 = vmatprep.subr.mxu0 0.0
    %89 = vmatpush1.msra.mxu0 0.0
    %90 = vmatprep.subr.mxu0 0.0
    %91 = vmatpush1.msra.mxu0 0.0
    %92 = vmatprep.subr.mxu0 0.0
    %93 = vmatpush1.msra.mxu0 0.0
    %94 = vmatprep.subr.mxu0 0.0
    %95 = vmatpush1.msra.mxu0 0.0
    %96 = vmatprep.subr.mxu0 0.0
    %97 = vmatpush1.msra.mxu0 0.0
    %98 = vmatprep.subr.mxu0 0.0
    %99 = vmatpush1.msra.mxu0 0.0
    %100 = vmatprep.subr.mxu0 0.0
    %101 = vmatpush1.msra.mxu0 0.0
    %102 = vmatprep.subr.mxu0 0.0
    %103 = vmatpush1.msra.mxu0 0.0
    %104 = vmatprep.subr.mxu0 0.0
    %105 = vmatpush1.msra.mxu0 0.0
    %106 = vmatprep.subr.mxu0 0.0
    %107 = vmatpush1.msra.mxu0 0.0
    %108 = vmatprep.subr.mxu0 0.0
    %109 = vmatpush1.msra.mxu0 0.0
    %110 = vmatprep.subr.mxu0 0.0
    %111 = vmatpush1.msra.mxu0 0.0
    %112 = vmatprep.subr.mxu0 0.0
    %113 = vmatpush1.msra.mxu0 0.0
    %114 = vmatprep.mubr.f32.mxu0 0.0
    %115 = vmatmul.mubr.f32.gmra.mrb[0].mxu0 %v41
    %v116 = vpop.f32.mrb[0].mxu0
    %v117 = vadd.f32 %v38, %v116
    %v118 = vpop.f32.mrb[0].mxu0
    %119 = vmatprep.mubr.f32.mxu0 0.0
    %120 = vmatmul.mubr.f32.gmra.mrb[0].mxu0 %v44
    %v121 = vpop.f32.mrb[0].mxu0
    %v122 = vadd.f32 %v38, %v121
    %v123 = vpop.f32.mrb[0].mxu0
    %124 = vdwg.mxu0
    %v125 = vlaneseq
    %v126 = vand.u32 %v125, 127
    %vm127 = vcmp.ge.s32.totalorder %v126, 64
    %vm128 = vcmp.lt.s32.totalorder %v126, 96
    %vm129 = vmand %vm127, %vm128
    %v130 = vsel %vm129, 1.0, 0.5
    %v131 = vsel %vm129, 0.0, 0.5
    %vm132 = vcmask 261120
    %v134 = vsel %vm132, 0.0, 0
    %136 = vmatprep.subr.mxu0 0.0
    %137 = vmatpush1.msra.mxu0 %v26
    %138 = vmatprep.subr.mxu0 0.0
    %139 = vmatpush1.msra.mxu0 %v27
    %140 = vmatprep.subr.mxu0 0.0
    %141 = vmatpush1.msra.mxu0 %v28
    %142 = vmatprep.subr.mxu0 0.0
    %143 = vmatpush1.msra.mxu0 %v29
    %144 = vmatprep.subr.mxu0 0.0
    %145 = vmatpush1.msra.mxu0 0.0
    %146 = vmatprep.subr.mxu0 0.0
    %147 = vmatpush1.msra.mxu0 0.0
    %148 = vmatprep.subr.mxu0 0.0
    %149 = vmatpush1.msra.mxu0 0.0
    %150 = vmatprep.subr.mxu0 0.0
    %151 = vmatpush1.msra.mxu0 0.0
    %152 = vmatprep.subr.mxu0 0.0
    %153 = vmatpush1.msra.mxu0 0.0
    %154 = vmatprep.subr.mxu0 0.0
    %155 = vmatpush1.msra.mxu0 0.0
    %156 = vmatprep.subr.mxu0 0.0
    %157 = vmatpush1.msra.mxu0 0.0
    %158 = vmatprep.subr.mxu0 0.0
    %159 = vmatpush1.msra.mxu0 0.0
    %160 = vmatprep.subr.mxu0 0.0
    %161 = vmatpush1.msra.mxu0 0.0
    %162 = vmatprep.subr.mxu0 0.0
    %163 = vmatpush1.msra.mxu0 0.0
    %164 = vmatprep.subr.mxu0 0.0
    %165 = vmatpush1.msra.mxu0 0.0
    %166 = vmatprep.subr.mxu0 0.0
    %167 = vmatpush1.msra.mxu0 0.0
    %168 = vmatprep.subr.mxu0 0.0
    %169 = vmatpush1.msra.mxu0 0.0
    %170 = vmatprep.subr.mxu0 0.0
    %171 = vmatpush1.msra.mxu0 0.0
    %172 = vmatprep.subr.mxu0 0.0
    %173 = vmatpush1.msra.mxu0 0.0
    %174 = vmatprep.subr.mxu0 0.0
    %175 = vmatpush1.msra.mxu0 0.0
    %176 = vmatprep.subr.mxu0 0.0
    %177 = vmatpush1.msra.mxu0 0.0
    %178 = vmatprep.subr.mxu0 0.0
    %179 = vmatpush1.msra.mxu0 0.0
    %180 = vmatprep.subr.mxu0 0.0
    %181 = vmatpush1.msra.mxu0 0.0
    %182 = vmatprep.subr.mxu0 0.0
    %183 = vmatpush1.msra.mxu0 0.0
    %184 = vmatprep.subr.mxu0 0.0
    %185 = vmatpush1.msra.mxu0 0.0
    %186 = vmatprep.subr.mxu0 0.0
    %187 = vmatpush1.msra.mxu0 0.0
    %188 = vmatprep.subr.mxu0 0.0
    %189 = vmatpush1.msra.mxu0 0.0
    %190 = vmatprep.subr.mxu0 0.0
    %191 = vmatpush1.msra.mxu0 0.0
    %192 = vmatprep.subr.mxu0 0.0
    %193 = vmatpush1.msra.mxu0 0.0
    %194 = vmatprep.subr.mxu0 0.0
    %195 = vmatpush1.msra.mxu0 0.0
    %196 = vmatprep.subr.mxu0 0.0
    %197 = vmatpush1.msra.mxu0 0.0
    %198 = vmatprep.subr.mxu0 0.0
    %199 = vmatpush1.msra.mxu0 0.0
    %200 = vmatprep.mubr.f32.mxu0 0.0
    %201 = vmatmul.mubr.f32.gmra.mrb[0].mxu0 %v134
    %v202 = vpop.f32.mrb[0].mxu0
    %v203 = vadd.f32 0.0, %v202
    %v204 = vpop.f32.mrb[0].mxu0
    %205 = vdwg.mxu0
    %v206 = vadd.f32 %v117, %v203
    %v207 = vtanh.pop %v206
    %v208 = vmul.f32 %v207, %v130
    %v209 = vadd.f32 %v208, %v131
    %v210 = vmul.f32 %v209, 0.0
    %212 = vrot.lane.b32.xlu0 %v209, 64
    %v213 = vpop.permute.xlu0 %212
    %v215 = vmul.f32 %v209, %v213
    %217 = vrot.lane.b32.xlu0 %v215, 32
    %v218 = vpop.permute.xlu0 %217
    %v220 = vadd.f32 %v210, %v218
    %v221 = vtanh.pop %v220
    %223 = vrot.lane.b32.xlu0 %v221, 64
    %v224 = vpop.permute.xlu0 %223
    %v226 = vmul.f32 %v209, %v224
    %228 = vrot.lane.b32.xlu0 %v226, 32
    %v229 = vpop.permute.xlu0 %228
    %v230 = vsel %vm132, %v229, 0
    %232 = vmatprep.subr.mxu0 0.0
    %233 = vmatpush1.msra.mxu0 %v26
    %234 = vmatprep.subr.mxu0 0.0
    %235 = vmatpush1.msra.mxu0 %v27
    %236 = vmatprep.subr.mxu0 0.0
    %237 = vmatpush1.msra.mxu0 %v28
    %238 = vmatprep.subr.mxu0 0.0
    %239 = vmatpush1.msra.mxu0 %v29
    %240 = vmatprep.subr.mxu0 0.0
    %241 = vmatpush1.msra.mxu0 0.0
    %242 = vmatprep.subr.mxu0 0.0
    %243 = vmatpush1.msra.mxu0 0.0
    %244 = vmatprep.subr.mxu0 0.0
    %245 = vmatpush1.msra.mxu0 0.0
    %246 = vmatprep.subr.mxu0 0.0
    %247 = vmatpush1.msra.mxu0 0.0
    %248 = vmatprep.subr.mxu0 0.0
    %249 = vmatpush1.msra.mxu0 0.0
    %250 = vmatprep.subr.mxu0 0.0
    %251 = vmatpush1.msra.mxu0 0.0
    %252 = vmatprep.subr.mxu0 0.0
    %253 = vmatpush1.msra.mxu0 0.0
    %254 = vmatprep.subr.mxu0 0.0
    %255 = vmatpush1.msra.mxu0 0.0
    %256 = vmatprep.subr.mxu0 0.0
    %257 = vmatpush1.msra.mxu0 0.0
    %258 = vmatprep.subr.mxu0 0.0
    %259 = vmatpush1.msra.mxu0 0.0
    %260 = vmatprep.subr.mxu0 0.0
    %261 = vmatpush1.msra.mxu0 0.0
    %262 = vmatprep.subr.mxu0 0.0
    %263 = vmatpush1.msra.mxu0 0.0
    %264 = vmatprep.subr.mxu0 0.0
    %265 = vmatpush1.msra.mxu0 0.0
    %266 = vmatprep.subr.mxu0 0.0
    %267 = vmatpush1.msra.mxu0 0.0
    %268 = vmatprep.subr.mxu0 0.0
    %269 = vmatpush1.msra.mxu0 0.0
    %270 = vmatprep.subr.mxu0 0.0
    %271 = vmatpush1.msra.mxu0 0.0
    %272 = vmatprep.subr.mxu0 0.0
    %273 = vmatpush1.msra.mxu0 0.0
    %274 = vmatprep.subr.mxu0 0.0
    %275 = vmatpush1.msra.mxu0 0.0
    %276 = vmatprep.subr.mxu0 0.0
    %277 = vmatpush1.msra.mxu0 0.0
    %278 = vmatprep.subr.mxu0 0.0
    %279 = vmatpush1.msra.mxu0 0.0
    %280 = vmatprep.subr.mxu0 0.0
    %281 = vmatpush1.msra.mxu0 0.0
    %282 = vmatprep.subr.mxu0 0.0
    %283 = vmatpush1.msra.mxu0 0.0
    %284 = vmatprep.subr.mxu0 0.0
    %285 = vmatpush1.msra.mxu0 0.0
    %286 = vmatprep.subr.mxu0 0.0
    %287 = vmatpush1.msra.mxu0 0.0
    %288 = vmatprep.subr.mxu0 0.0
    %289 = vmatpush1.msra.mxu0 0.0
    %290 = vmatprep.subr.mxu0 0.0
    %291 = vmatpush1.msra.mxu0 0.0
    %292 = vmatprep.subr.mxu0 0.0
    %293 = vmatpush1.msra.mxu0 0.0
    %294 = vmatprep.subr.mxu0 0.0
    %295 = vmatpush1.msra.mxu0 0.0
    %296 = vmatprep.mubr.f32.mxu0 0.0
    %297 = vmatmul.mubr.f32.gmra.mrb[0].mxu0 %v230
    %v298 = vpop.f32.mrb[0].mxu0
    %v299 = vadd.f32 0.0, %v298
    %v300 = vpop.f32.mrb[0].mxu0
    %301 = vdwg.mxu0
    %v303 = vrot.slane %v299, 6
    %v305 = vadd.f32 %v117, %v303
    %v306 = vtanh.pop %v305
    %v307 = vmul.f32 %v306, %v130
    %v308 = vadd.f32 %v307, %v131
    %v310 = vrot.slane %v220, 6
    %v312 = vmul.f32 %v308, %v310
    %314 = vrot.lane.b32.xlu0 %v308, 64
    %v315 = vpop.permute.xlu0 %314
    %v317 = vmul.f32 %v308, %v315
    %319 = vrot.lane.b32.xlu0 %v317, 32
    %v320 = vpop.permute.xlu0 %319
    %v322 = vadd.f32 %v312, %v320
    %v323 = vtanh.pop %v322
    %325 = vrot.lane.b32.xlu0 %v323, 64
    %v326 = vpop.permute.xlu0 %325
    %v328 = vmul.f32 %v308, %v326
    %v330 = vrot.slane %v328, 2
    %331 = vrot.lane.b32.xlu0 %v330, 32
    %v332 = vpop.permute.xlu0 %331
    %v333 = vsel %vm132, %v332, 0
    %335 = vmatprep.subr.mxu0 0.0
    %336 = vmatpush1.msra.mxu0 %v26
    %337 = vmatprep.subr.mxu0 0.0
    %338 = vmatpush1.msra.mxu0 %v27
    %339 = vmatprep.subr.mxu0 0.0
    %340 = vmatpush1.msra.mxu0 %v28
    %341 = vmatprep.subr.mxu0 0.0
    %342 = vmatpush1.msra.mxu0 %v29
    %343 = vmatprep.subr.mxu0 0.0
    %344 = vmatpush1.msra.mxu0 0.0
    %345 = vmatprep.subr.mxu0 0.0
    %346 = vmatpush1.msra.mxu0 0.0
    %347 = vmatprep.subr.mxu0 0.0
    %348 = vmatpush1.msra.mxu0 0.0
    %349 = vmatprep.subr.mxu0 0.0
    %350 = vmatpush1.msra.mxu0 0.0
    %351 = vmatprep.subr.mxu0 0.0
    %352 = vmatpush1.msra.mxu0 0.0
    %353 = vmatprep.subr.mxu0 0.0
    %354 = vmatpush1.msra.mxu0 0.0
    %355 = vmatprep.subr.mxu0 0.0
    %356 = vmatpush1.msra.mxu0 0.0
    %357 = vmatprep.subr.mxu0 0.0
    %358 = vmatpush1.msra.mxu0 0.0
    %359 = vmatprep.subr.mxu0 0.0
    %360 = vmatpush1.msra.mxu0 0.0
    %361 = vmatprep.subr.mxu0 0.0
    %362 = vmatpush1.msra.mxu0 0.0
    %363 = vmatprep.subr.mxu0 0.0
    %364 = vmatpush1.msra.mxu0 0.0
    %365 = vmatprep.subr.mxu0 0.0
    %366 = vmatpush1.msra.mxu0 0.0
    %367 = vmatprep.subr.mxu0 0.0
    %368 = vmatpush1.msra.mxu0 0.0
    %369 = vmatprep.subr.mxu0 0.0
    %370 = vmatpush1.msra.mxu0 0.0
    %371 = vmatprep.subr.mxu0 0.0
    %372 = vmatpush1.msra.mxu0 0.0
    %373 = vmatprep.subr.mxu0 0.0
    %374 = vmatpush1.msra.mxu0 0.0
    %375 = vmatprep.subr.mxu0 0.0
    %376 = vmatpush1.msra.mxu0 0.0
    %377 = vmatprep.subr.mxu0 0.0
    %378 = vmatpush1.msra.mxu0 0.0
    %379 = vmatprep.subr.mxu0 0.0
    %380 = vmatpush1.msra.mxu0 0.0
    %381 = vmatprep.subr.mxu0 0.0
    %382 = vmatpush1.msra.mxu0 0.0
    %383 = vmatprep.subr.mxu0 0.0
    %384 = vmatpush1.msra.mxu0 0.0
    %385 = vmatprep.subr.mxu0 0.0
    %386 = vmatpush1.msra.mxu0 0.0
    %387 = vmatprep.subr.mxu0 0.0
    %388 = vmatpush1.msra.mxu0 0.0
    %389 = vmatprep.subr.mxu0 0.0
    %390 = vmatpush1.msra.mxu0 0.0
    %391 = vmatprep.subr.mxu0 0.0
    %392 = vmatpush1.msra.mxu0 0.0
    %393 = vmatprep.subr.mxu0 0.0
    %394 = vmatpush1.msra.mxu0 0.0
    %395 = vmatprep.subr.mxu0 0.0
    %396 = vmatpush1.msra.mxu0 0.0
    %397 = vmatprep.subr.mxu0 0.0
    %398 = vmatpush1.msra.mxu0 0.0
    %399 = vmatprep.mubr.f32.mxu0 0.0
    %400 = vmatmul.mubr.f32.gmra.mrb[0].mxu0 %v333
    %v401 = vpop.f32.mrb[0].mxu0
    %v402 = vadd.f32 0.0, %v401
    %v403 = vpop.f32.mrb[0].mxu0
    %404 = vdwg.mxu0
    %v406 = vrot.slane %v402, 4
    %v408 = vadd.f32 %v117, %v406
    %v409 = vtanh.pop %v408
    %v410 = vmul.f32 %v409, %v130
    %v411 = vadd.f32 %v410, %v131
    %v413 = vrot.slane %v322, 6
    %v415 = vmul.f32 %v411, %v413
    %417 = vrot.lane.b32.xlu0 %v411, 64
    %v418 = vpop.permute.xlu0 %417
    %v420 = vmul.f32 %v411, %v418
    %422 = vrot.lane.b32.xlu0 %v420, 32
    %v423 = vpop.permute.xlu0 %422
    %v425 = vadd.f32 %v415, %v423
    %v426 = vtanh.pop %v425
    %428 = vrot.lane.b32.xlu0 %v426, 64
    %v429 = vpop.permute.xlu0 %428
    %v431 = vmul.f32 %v411, %v429
    %v433 = vrot.slane %v431, 4
    %434 = vrot.lane.b32.xlu0 %v433, 32
    %v435 = vpop.permute.xlu0 %434
    %v436 = vsel %vm132, %v435, 0
    %438 = vmatprep.subr.mxu0 0.0
    %439 = vmatpush1.msra.mxu0 %v26
    %440 = vmatprep.subr.mxu0 0.0
    %441 = vmatpush1.msra.mxu0 %v27
    %442 = vmatprep.subr.mxu0 0.0
    %443 = vmatpush1.msra.mxu0 %v28
    %444 = vmatprep.subr.mxu0 0.0
    %445 = vmatpush1.msra.mxu0 %v29
    %446 = vmatprep.subr.mxu0 0.0
    %447 = vmatpush1.msra.mxu0 0.0
    %448 = vmatprep.subr.mxu0 0.0
    %449 = vmatpush1.msra.mxu0 0.0
    %450 = vmatprep.subr.mxu0 0.0
    %451 = vmatpush1.msra.mxu0 0.0
    %452 = vmatprep.subr.mxu0 0.0
    %453 = vmatpush1.msra.mxu0 0.0
    %454 = vmatprep.subr.mxu0 0.0
    %455 = vmatpush1.msra.mxu0 0.0
    %456 = vmatprep.subr.mxu0 0.0
    %457 = vmatpush1.msra.mxu0 0.0
    %458 = vmatprep.subr.mxu0 0.0
    %459 = vmatpush1.msra.mxu0 0.0
    %460 = vmatprep.subr.mxu0 0.0
    %461 = vmatpush1.msra.mxu0 0.0
    %462 = vmatprep.subr.mxu0 0.0
    %463 = vmatpush1.msra.mxu0 0.0
    %464 = vmatprep.subr.mxu0 0.0
    %465 = vmatpush1.msra.mxu0 0.0
    %466 = vmatprep.subr.mxu0 0.0
    %467 = vmatpush1.msra.mxu0 0.0
    %468 = vmatprep.subr.mxu0 0.0
    %469 = vmatpush1.msra.mxu0 0.0
    %470 = vmatprep.subr.mxu0 0.0
    %471 = vmatpush1.msra.mxu0 0.0
    %472 = vmatprep.subr.mxu0 0.0
    %473 = vmatpush1.msra.mxu0 0.0
    %474 = vmatprep.subr.mxu0 0.0
    %475 = vmatpush1.msra.mxu0 0.0
    %476 = vmatprep.subr.mxu0 0.0
    %477 = vmatpush1.msra.mxu0 0.0
    %478 = vmatprep.subr.mxu0 0.0
    %479 = vmatpush1.msra.mxu0 0.0
    %480 = vmatprep.subr.mxu0 0.0
    %481 = vmatpush1.msra.mxu0 0.0
    %482 = vmatprep.subr.mxu0 0.0
    %483 = vmatpush1.msra.mxu0 0.0
    %484 = vmatprep.subr.mxu0 0.0
    %485 = vmatpush1.msra.mxu0 0.0
    %486 = vmatprep.subr.mxu0 0.0
    %487 = vmatpush1.msra.mxu0 0.0
    %488 = vmatprep.subr.mxu0 0.0
    %489 = vmatpush1.msra.mxu0 0.0
    %490 = vmatprep.subr.mxu0 0.0
    %491 = vmatpush1.msra.mxu0 0.0
    %492 = vmatprep.subr.mxu0 0.0
    %493 = vmatpush1.msra.mxu0 0.0
    %494 = vmatprep.subr.mxu0 0.0
    %495 = vmatpush1.msra.mxu0 0.0
    %496 = vmatprep.subr.mxu0 0.0
    %497 = vmatpush1.msra.mxu0 0.0
    %498 = vmatprep.subr.mxu0 0.0
    %499 = vmatpush1.msra.mxu0 0.0
    %500 = vmatprep.subr.mxu0 0.0
    %501 = vmatpush1.msra.mxu0 0.0
    %502 = vmatprep.mubr.f32.mxu0 0.0
    %503 = vmatmul.mubr.f32.gmra.mrb[0].mxu0 %v436
    %v504 = vpop.f32.mrb[0].mxu0
    %v505 = vadd.f32 0.0, %v504
    %v506 = vpop.f32.mrb[0].mxu0
    %507 = vdwg.mxu0
    %v509 = vrot.slane %v505, 2
    %v511 = vadd.f32 %v117, %v509
    %v512 = vtanh.pop %v511
    %v513 = vmul.f32 %v512, %v130
    %v514 = vadd.f32 %v513, %v131
    %v516 = vrot.slane %v425, 6
    %v518 = vmul.f32 %v514, %v516
    %520 = vrot.lane.b32.xlu0 %v514, 64
    %v521 = vpop.permute.xlu0 %520
    %v523 = vmul.f32 %v514, %v521
    %525 = vrot.lane.b32.xlu0 %v523, 32
    %v526 = vpop.permute.xlu0 %525
    %v528 = vadd.f32 %v518, %v526
    %v529 = vtanh.pop %v528
    %531 = vrot.lane.b32.xlu0 %v529, 64
    %v532 = vpop.permute.xlu0 %531
    %v534 = vmul.f32 %v514, %v532
    %v536 = vrot.slane %v534, 6
    %537 = vrot.lane.b32.xlu0 %v536, 32
    %v538 = vpop.permute.xlu0 %537
    %v539 = vsel %vm132, %v538, 0
    %541 = vmatprep.subr.mxu0 0.0
    %542 = vmatpush1.msra.mxu0 %v26
    %543 = vmatprep.subr.mxu0 0.0
    %544 = vmatpush1.msra.mxu0 %v27
    %545 = vmatprep.subr.mxu0 0.0
    %546 = vmatpush1.msra.mxu0 %v28
    %547 = vmatprep.subr.mxu0 0.0
    %548 = vmatpush1.msra.mxu0 %v29
    %549 = vmatprep.subr.mxu0 0.0
    %550 = vmatpush1.msra.mxu0 0.0
    %551 = vmatprep.subr.mxu0 0.0
    %552 = vmatpush1.msra.mxu0 0.0
    %553 = vmatprep.subr.mxu0 0.0
    %554 = vmatpush1.msra.mxu0 0.0
    %555 = vmatprep.subr.mxu0 0.0
    %556 = vmatpush1.msra.mxu0 0.0
    %557 = vmatprep.subr.mxu0 0.0
    %558 = vmatpush1.msra.mxu0 0.0
    %559 = vmatprep.subr.mxu0 0.0
    %560 = vmatpush1.msra.mxu0 0.0
    %561 = vmatprep.subr.mxu0 0.0
    %562 = vmatpush1.msra.mxu0 0.0
    %563 = vmatprep.subr.mxu0 0.0
    %564 = vmatpush1.msra.mxu0 0.0
    %565 = vmatprep.subr.mxu0 0.0
    %566 = vmatpush1.msra.mxu0 0.0
    %567 = vmatprep.subr.mxu0 0.0
    %568 = vmatpush1.msra.mxu0 0.0
    %569 = vmatprep.subr.mxu0 0.0
    %570 = vmatpush1.msra.mxu0 0.0
    %571 = vmatprep.subr.mxu0 0.0
    %572 = vmatpush1.msra.mxu0 0.0
    %573 = vmatprep.subr.mxu0 0.0
    %574 = vmatpush1.msra.mxu0 0.0
    %575 = vmatprep.subr.mxu0 0.0
    %576 = vmatpush1.msra.mxu0 0.0
    %577 = vmatprep.subr.mxu0 0.0
    %578 = vmatpush1.msra.mxu0 0.0
    %579 = vmatprep.subr.mxu0 0.0
    %580 = vmatpush1.msra.mxu0 0.0
    %581 = vmatprep.subr.mxu0 0.0
    %582 = vmatpush1.msra.mxu0 0.0
    %583 = vmatprep.subr.mxu0 0.0
    %584 = vmatpush1.msra.mxu0 0.0
    %585 = vmatprep.subr.mxu0 0.0
    %586 = vmatpush1.msra.mxu0 0.0
    %587 = vmatprep.subr.mxu0 0.0
    %588 = vmatpush1.msra.mxu0 0.0
    %589 = vmatprep.subr.mxu0 0.0
    %590 = vmatpush1.msra.mxu0 0.0
    %591 = vmatprep.subr.mxu0 0.0
    %592 = vmatpush1.msra.mxu0 0.0
    %593 = vmatprep.subr.mxu0 0.0
    %594 = vmatpush1.msra.mxu0 0.0
    %595 = vmatprep.subr.mxu0 0.0
    %596 = vmatpush1.msra.mxu0 0.0
    %597 = vmatprep.subr.mxu0 0.0
    %598 = vmatpush1.msra.mxu0 0.0
    %599 = vmatprep.subr.mxu0 0.0
    %600 = vmatpush1.msra.mxu0 0.0
    %601 = vmatprep.subr.mxu0 0.0
    %602 = vmatpush1.msra.mxu0 0.0
    %603 = vmatprep.subr.mxu0 0.0
    %604 = vmatpush1.msra.mxu0 0.0
    %605 = vmatprep.mubr.f32.mxu0 0.0
    %606 = vmatmul.mubr.f32.gmra.mrb[0].mxu0 %v539
    %v607 = vpop.f32.mrb[0].mxu0
    %v608 = vadd.f32 0.0, %v607
    %v609 = vpop.f32.mrb[0].mxu0
    %610 = vdwg.mxu0
    %v611 = vadd.f32 %v122, %v608
    %v612 = vtanh.pop %v611
    %v613 = vmul.f32 %v612, %v130
    %v614 = vadd.f32 %v613, %v131
    %v616 = vrot.slane %v528, 6
    %v618 = vmul.f32 %v614, %v616
    %620 = vrot.lane.b32.xlu0 %v614, 64
    %v621 = vpop.permute.xlu0 %620
    %v623 = vmul.f32 %v614, %v621
    %625 = vrot.lane.b32.xlu0 %v623, 32
    %v626 = vpop.permute.xlu0 %625
    %v628 = vadd.f32 %v618, %v626
    %v629 = vtanh.pop %v628
    %631 = vrot.lane.b32.xlu0 %v629, 64
    %v632 = vpop.permute.xlu0 %631
    %v634 = vmul.f32 %v614, %v632
    %636 = vrot.lane.b32.xlu0 %v634, 32
    %v637 = vpop.permute.xlu0 %636
    %v638 = vsel %vm132, %v637, 0
    %640 = vmatprep.subr.mxu0 0.0
    %641 = vmatpush1.msra.mxu0 %v26
    %642 = vmatprep.subr.mxu0 0.0
    %643 = vmatpush1.msra.mxu0 %v27
    %644 = vmatprep.subr.mxu0 0.0
    %645 = vmatpush1.msra.mxu0 %v28
    %646 = vmatprep.subr.mxu0 0.0
    %647 = vmatpush1.msra.mxu0 %v29
    %648 = vmatprep.subr.mxu0 0.0
    %649 = vmatpush1.msra.mxu0 0.0
    %650 = vmatprep.subr.mxu0 0.0
    %651 = vmatpush1.msra.mxu0 0.0
    %652 = vmatprep.subr.mxu0 0.0
    %653 = vmatpush1.msra.mxu0 0.0
    %654 = vmatprep.subr.mxu0 0.0
    %655 = vmatpush1.msra.mxu0 0.0
    %656 = vmatprep.subr.mxu0 0.0
    %657 = vmatpush1.msra.mxu0 0.0
    %658 = vmatprep.subr.mxu0 0.0
    %659 = vmatpush1.msra.mxu0 0.0
    %660 = vmatprep.subr.mxu0 0.0
    %661 = vmatpush1.msra.mxu0 0.0
    %662 = vmatprep.subr.mxu0 0.0
    %663 = vmatpush1.msra.mxu0 0.0
    %664 = vmatprep.subr.mxu0 0.0
    %665 = vmatpush1.msra.mxu0 0.0
    %666 = vmatprep.subr.mxu0 0.0
    %667 = vmatpush1.msra.mxu0 0.0
    %668 = vmatprep.subr.mxu0 0.0
    %669 = vmatpush1.msra.mxu0 0.0
    %670 = vmatprep.subr.mxu0 0.0
    %671 = vmatpush1.msra.mxu0 0.0
    %672 = vmatprep.subr.mxu0 0.0
    %673 = vmatpush1.msra.mxu0 0.0
    %674 = vmatprep.subr.mxu0 0.0
    %675 = vmatpush1.msra.mxu0 0.0
    %676 = vmatprep.subr.mxu0 0.0
    %677 = vmatpush1.msra.mxu0 0.0
    %678 = vmatprep.subr.mxu0 0.0
    %679 = vmatpush1.msra.mxu0 0.0
    %680 = vmatprep.subr.mxu0 0.0
    %681 = vmatpush1.msra.mxu0 0.0
    %682 = vmatprep.subr.mxu0 0.0
    %683 = vmatpush1.msra.mxu0 0.0
    %684 = vmatprep.subr.mxu0 0.0
    %685 = vmatpush1.msra.mxu0 0.0
    %686 = vmatprep.subr.mxu0 0.0
    %687 = vmatpush1.msra.mxu0 0.0
    %688 = vmatprep.subr.mxu0 0.0
    %689 = vmatpush1.msra.mxu0 0.0
    %690 = vmatprep.subr.mxu0 0.0
    %691 = vmatpush1.msra.mxu0 0.0
    %692 = vmatprep.subr.mxu0 0.0
    %693 = vmatpush1.msra.mxu0 0.0
    %694 = vmatprep.subr.mxu0 0.0
    %695 = vmatpush1.msra.mxu0 0.0
    %696 = vmatprep.subr.mxu0 0.0
    %697 = vmatpush1.msra.mxu0 0.0
    %698 = vmatprep.subr.mxu0 0.0
    %699 = vmatpush1.msra.mxu0 0.0
    %700 = vmatprep.subr.mxu0 0.0
    %701 = vmatpush1.msra.mxu0 0.0
    %702 = vmatprep.subr.mxu0 0.0
    %703 = vmatpush1.msra.mxu0 0.0
    %704 = vmatprep.mubr.f32.mxu0 0.0
    %705 = vmatmul.mubr.f32.gmra.mrb[0].mxu0 %v638
    %v706 = vpop.f32.mrb[0].mxu0
    %v707 = vadd.f32 0.0, %v706
    %v708 = vpop.f32.mrb[0].mxu0
    %709 = vdwg.mxu0
    %v711 = vrot.slane %v707, 6
    %v713 = vadd.f32 %v122, %v711
    %v714 = vtanh.pop %v713
    %v715 = vmul.f32 %v714, %v130
    %v716 = vadd.f32 %v715, %v131
    %v718 = vrot.slane %v628, 6
    %v720 = vmul.f32 %v716, %v718
    %722 = vrot.lane.b32.xlu0 %v716, 64
    %v723 = vpop.permute.xlu0 %722
    %v725 = vmul.f32 %v716, %v723
    %727 = vrot.lane.b32.xlu0 %v725, 32
    %v728 = vpop.permute.xlu0 %727
    %v730 = vadd.f32 %v720, %v728
    %v731 = vtanh.pop %v730
    %733 = vrot.lane.b32.xlu0 %v731, 64
    %v734 = vpop.permute.xlu0 %733
    %v736 = vmul.f32 %v716, %v734
    %v738 = vrot.slane %v736, 2
    %739 = vrot.lane.b32.xlu0 %v738, 32
    %v740 = vpop.permute.xlu0 %739
    %v741 = vsel %vm132, %v740, 0
    %743 = vmatprep.subr.mxu0 0.0
    %744 = vmatpush1.msra.mxu0 %v26
    %745 = vmatprep.subr.mxu0 0.0
    %746 = vmatpush1.msra.mxu0 %v27
    %747 = vmatprep.subr.mxu0 0.0
    %748 = vmatpush1.msra.mxu0 %v28
    %749 = vmatprep.subr.mxu0 0.0
    %750 = vmatpush1.msra.mxu0 %v29
    %751 = vmatprep.subr.mxu0 0.0
    %752 = vmatpush1.msra.mxu0 0.0
    %753 = vmatprep.subr.mxu0 0.0
    %754 = vmatpush1.msra.mxu0 0.0
    %755 = vmatprep.subr.mxu0 0.0
    %756 = vmatpush1.msra.mxu0 0.0
    %757 = vmatprep.subr.mxu0 0.0
    %758 = vmatpush1.msra.mxu0 0.0
    %759 = vmatprep.subr.mxu0 0.0
    %760 = vmatpush1.msra.mxu0 0.0
    %761 = vmatprep.subr.mxu0 0.0
    %762 = vmatpush1.msra.mxu0 0.0
    %763 = vmatprep.subr.mxu0 0.0
    %764 = vmatpush1.msra.mxu0 0.0
    %765 = vmatprep.subr.mxu0 0.0
    %766 = vmatpush1.msra.mxu0 0.0
    %767 = vmatprep.subr.mxu0 0.0
    %768 = vmatpush1.msra.mxu0 0.0
    %769 = vmatprep.subr.mxu0 0.0
    %770 = vmatpush1.msra.mxu0 0.0
    %771 = vmatprep.subr.mxu0 0.0
    %772 = vmatpush1.msra.mxu0 0.0
    %773 = vmatprep.subr.mxu0 0.0
    %774 = vmatpush1.msra.mxu0 0.0
    %775 = vmatprep.subr.mxu0 0.0
    %776 = vmatpush1.msra.mxu0 0.0
    %777 = vmatprep.subr.mxu0 0.0
    %778 = vmatpush1.msra.mxu0 0.0
    %779 = vmatprep.subr.mxu0 0.0
    %780 = vmatpush1.msra.mxu0 0.0
    %781 = vmatprep.subr.mxu0 0.0
    %782 = vmatpush1.msra.mxu0 0.0
    %783 = vmatprep.subr.mxu0 0.0
    %784 = vmatpush1.msra.mxu0 0.0
    %785 = vmatprep.subr.mxu0 0.0
    %786 = vmatpush1.msra.mxu0 0.0
    %787 = vmatprep.subr.mxu0 0.0
    %788 = vmatpush1.msra.mxu0 0.0
    %789 = vmatprep.subr.mxu0 0.0
    %790 = vmatpush1.msra.mxu0 0.0
    %791 = vmatprep.subr.mxu0 0.0
    %792 = vmatpush1.msra.mxu0 0.0
    %793 = vmatprep.subr.mxu0 0.0
    %794 = vmatpush1.msra.mxu0 0.0
    %795 = vmatprep.subr.mxu0 0.0
    %796 = vmatpush1.msra.mxu0 0.0
    %797 = vmatprep.subr.mxu0 0.0
    %798 = vmatpush1.msra.mxu0 0.0
    %799 = vmatprep.subr.mxu0 0.0
    %800 = vmatpush1.msra.mxu0 0.0
    %801 = vmatprep.subr.mxu0 0.0
    %802 = vmatpush1.msra.mxu0 0.0
    %803 = vmatprep.subr.mxu0 0.0
    %804 = vmatpush1.msra.mxu0 0.0
    %805 = vmatprep.subr.mxu0 0.0
    %806 = vmatpush1.msra.mxu0 0.0
    %807 = vmatprep.mubr.f32.mxu0 0.0
    %808 = vmatmul.mubr.f32.gmra.mrb[0].mxu0 %v741
    %v809 = vpop.f32.mrb[0].mxu0
    %v810 = vadd.f32 0.0, %v809
    %v811 = vpop.f32.mrb[0].mxu0
    %812 = vdwg.mxu0
    %v814 = vrot.slane %v810, 4
    %v816 = vadd.f32 %v122, %v814
    %v817 = vtanh.pop %v816
    %v818 = vmul.f32 %v817, %v130
    %v819 = vadd.f32 %v818, %v131
    %v821 = vrot.slane %v730, 6
    %v823 = vmul.f32 %v819, %v821
    %825 = vrot.lane.b32.xlu0 %v819, 64
    %v826 = vpop.permute.xlu0 %825
    %v828 = vmul.f32 %v819, %v826
    %830 = vrot.lane.b32.xlu0 %v828, 32
    %v831 = vpop.permute.xlu0 %830
    %v833 = vadd.f32 %v823, %v831
    %v834 = vtanh.pop %v833
    %836 = vrot.lane.b32.xlu0 %v834, 64
    %v837 = vpop.permute.xlu0 %836
    %v839 = vmul.f32 %v819, %v837
    %v841 = vrot.slane %v839, 4
    %842 = vrot.lane.b32.xlu0 %v841, 32
    %v843 = vpop.permute.xlu0 %842
    %v844 = vsel %vm132, %v843, 0
    %846 = vmatprep.subr.mxu0 0.0
    %847 = vmatpush1.msra.mxu0 %v26
    %848 = vmatprep.subr.mxu0 0.0
    %849 = vmatpush1.msra.mxu0 %v27
    %850 = vmatprep.subr.mxu0 0.0
    %851 = vmatpush1.msra.mxu0 %v28
    %852 = vmatprep.subr.mxu0 0.0
    %853 = vmatpush1.msra.mxu0 %v29
    %854 = vmatprep.subr.mxu0 0.0
    %855 = vmatpush1.msra.mxu0 0.0
    %856 = vmatprep.subr.mxu0 0.0
    %857 = vmatpush1.msra.mxu0 0.0
    %858 = vmatprep.subr.mxu0 0.0
    %859 = vmatpush1.msra.mxu0 0.0
    %860 = vmatprep.subr.mxu0 0.0
    %861 = vmatpush1.msra.mxu0 0.0
    %862 = vmatprep.subr.mxu0 0.0
    %863 = vmatpush1.msra.mxu0 0.0
    %864 = vmatprep.subr.mxu0 0.0
    %865 = vmatpush1.msra.mxu0 0.0
    %866 = vmatprep.subr.mxu0 0.0
    %867 = vmatpush1.msra.mxu0 0.0
    %868 = vmatprep.subr.mxu0 0.0
    %869 = vmatpush1.msra.mxu0 0.0
    %870 = vmatprep.subr.mxu0 0.0
    %871 = vmatpush1.msra.mxu0 0.0
    %872 = vmatprep.subr.mxu0 0.0
    %873 = vmatpush1.msra.mxu0 0.0
    %874 = vmatprep.subr.mxu0 0.0
    %875 = vmatpush1.msra.mxu0 0.0
    %876 = vmatprep.subr.mxu0 0.0
    %877 = vmatpush1.msra.mxu0 0.0
    %878 = vmatprep.subr.mxu0 0.0
    %879 = vmatpush1.msra.mxu0 0.0
    %880 = vmatprep.subr.mxu0 0.0
    %881 = vmatpush1.msra.mxu0 0.0
    %882 = vmatprep.subr.mxu0 0.0
    %883 = vmatpush1.msra.mxu0 0.0
    %884 = vmatprep.subr.mxu0 0.0
    %885 = vmatpush1.msra.mxu0 0.0
    %886 = vmatprep.subr.mxu0 0.0
    %887 = vmatpush1.msra.mxu0 0.0
    %888 = vmatprep.subr.mxu0 0.0
    %889 = vmatpush1.msra.mxu0 0.0
    %890 = vmatprep.subr.mxu0 0.0
    %891 = vmatpush1.msra.mxu0 0.0
    %892 = vmatprep.subr.mxu0 0.0
    %893 = vmatpush1.msra.mxu0 0.0
    %894 = vmatprep.subr.mxu0 0.0
    %895 = vmatpush1.msra.mxu0 0.0
    %896 = vmatprep.subr.mxu0 0.0
    %897 = vmatpush1.msra.mxu0 0.0
    %898 = vmatprep.subr.mxu0 0.0
    %899 = vmatpush1.msra.mxu0 0.0
    %900 = vmatprep.subr.mxu0 0.0
    %901 = vmatpush1.msra.mxu0 0.0
    %902 = vmatprep.subr.mxu0 0.0
    %903 = vmatpush1.msra.mxu0 0.0
    %904 = vmatprep.subr.mxu0 0.0
    %905 = vmatpush1.msra.mxu0 0.0
    %906 = vmatprep.subr.mxu0 0.0
    %907 = vmatpush1.msra.mxu0 0.0
    %908 = vmatprep.subr.mxu0 0.0
    %909 = vmatpush1.msra.mxu0 0.0
    %910 = vmatprep.mubr.f32.mxu0 0.0
    %911 = vmatmul.mubr.f32.gmra.mrb[0].mxu0 %v844
    %v912 = vpop.f32.mrb[0].mxu0
    %v913 = vadd.f32 0.0, %v912
    %v914 = vpop.f32.mrb[0].mxu0
    %915 = vdwg.mxu0
    %v917 = vrot.slane %v913, 2
    %v919 = vadd.f32 %v122, %v917
    %v920 = vtanh.pop %v919
    %v921 = vmul.f32 %v920, %v130
    %v922 = vadd.f32 %v921, %v131
    %v924 = vrot.slane %v833, 6
    %v926 = vmul.f32 %v922, %v924
    %928 = vrot.lane.b32.xlu0 %v922, 64
    %v929 = vpop.permute.xlu0 %928
    %v931 = vmul.f32 %v922, %v929
    %933 = vrot.lane.b32.xlu0 %v931, 32
    %v934 = vpop.permute.xlu0 %933
    %v936 = vadd.f32 %v926, %v934
    %v937 = vtanh.pop %v936
    %939 = vrot.lane.b32.xlu0 %v937, 64
    %v940 = vpop.permute.xlu0 %939
    %v942 = vmul.f32 %v922, %v940
    %v943 = vmul.f32 %v226, %v226
    %945 = vrot.lane.b32.xlu0 %v943, 32
    %v946 = vpop.permute.xlu0 %945
    %vm948 = vcmask 254976
    %v949 = vsel %vm948, %v946, 0.0
    %950 = vadd.xlane.f32.xlu0 %v949
    %v951 = vpop.xlane.xlu0 %950
    %v952 = vmul.f32 %v328, %v328
    %954 = vrot.lane.b32.xlu0 %v952, 32
    %v955 = vpop.permute.xlu0 %954
    %vm957 = vcmask 257026
    %v958 = vsel %vm957, %v955, 0.0
    %959 = vadd.xlane.f32.xlu0 %v958
    %v960 = vpop.xlane.xlu0 %959
    %v961 = vmul.f32 %v431, %v431
    %963 = vrot.lane.b32.xlu0 %v961, 32
    %v964 = vpop.permute.xlu0 %963
    %vm966 = vcmask 259076
    %v967 = vsel %vm966, %v964, 0.0
    %968 = vadd.xlane.f32.xlu0 %v967
    %v969 = vpop.xlane.xlu0 %968
    %v970 = vmul.f32 %v534, %v534
    %972 = vrot.lane.b32.xlu0 %v970, 32
    %v973 = vpop.permute.xlu0 %972
    %vm975 = vcmask 261126
    %v976 = vsel %vm975, %v973, 0.0
    %977 = vadd.xlane.f32.xlu0 %v976
    %v978 = vpop.xlane.xlu0 %977
    %v979 = vmul.f32 %v634, %v634
    %981 = vrot.lane.b32.xlu0 %v979, 32
    %v982 = vpop.permute.xlu0 %981
    %v984 = vsel %vm948, %v982, 0.0
    %985 = vadd.xlane.f32.xlu0 %v984
    %v986 = vpop.xlane.xlu0 %985
    %v987 = vmul.f32 %v736, %v736
    %989 = vrot.lane.b32.xlu0 %v987, 32
    %v990 = vpop.permute.xlu0 %989
    %v992 = vsel %vm957, %v990, 0.0
    %993 = vadd.xlane.f32.xlu0 %v992
    %v994 = vpop.xlane.xlu0 %993
    %v995 = vmul.f32 %v839, %v839
    %997 = vrot.lane.b32.xlu0 %v995, 32
    %v998 = vpop.permute.xlu0 %997
    %v1000 = vsel %vm966, %v998, 0.0
    %1001 = vadd.xlane.f32.xlu0 %v1000
    %v1002 = vpop.xlane.xlu0 %1001
    %v1003 = vmul.f32 %v942, %v942
    %1005 = vrot.lane.b32.xlu0 %v1003, 32
    %v1006 = vpop.permute.xlu0 %1005
    %v1008 = vsel %vm975, %v1006, 0.0
    %1009 = vadd.xlane.f32.xlu0 %v1008
    %v1010 = vpop.xlane.xlu0 %1009
    %v1012 = vrot.slane %v960, 2
    %v1015 = vrot.slane %v969, 4
    %v1018 = vrot.slane %v978, 6
    %v1021 = vrot.slane %v994, 2
    %v1024 = vrot.slane %v1002, 4
    %v1027 = vrot.slane %v1010, 6
    %vm1029 = vcmask 7168
    %v1030 = vsel %vm1029, %v951, %v1012
    %vm1031 = vcmask 15360
    %v1032 = vsel %vm1031, %v1030, %v1015
    %vm1033 = vcmask 23552
    %v1034 = vsel %vm1033, %v1032, %v1018
    %v1035 = vsel %vm39, %v1034, %v986
    %vm1036 = vcmask 39936
    %v1037 = vsel %vm1036, %v1035, %v1021
    %vm1038 = vcmask 48128
    %v1039 = vsel %vm1038, %v1037, %v1024
    %vm1040 = vcmask 56320
    %v1041 = vsel %vm1040, %v1039, %v1027
    %v1042 = vtanh.pop %v1041
    %vm1043 = vcmask 58368
    %v1044 = vsel %vm1043, %v1042, -inf
    %1045 = vmax.xlane.f32.xlu0 %v1044
    %v1046 = vpop.xlane.xlu0 %1045
    %v1047 = vsub.f32 %v1042, %v1046
    %v1048 = vmul.f32 %v1047, 1.442695
    %v1049 = vpow.pop %v1048
    %v1050 = vsel %vm1043, %v1049, 0.0
    %1051 = vadd.xlane.f32.xlu0 %v1050
    %v1052 = vpop.xlane.xlu0 %1051
    %1054 = vset.pattern.permute.xlu0 0
    %1055 = vperm.xlu0 %1054, %v1049
    %v1056 = vpop.permute.xlu0 %1055
    %v1058 = vmul.f32 %v1056, %v226
    %1059 = vset.pattern.permute.xlu0 1
    %1060 = vperm.xlu0 %1059, %v1049
    %v1061 = vpop.permute.xlu0 %1060
    %v1064 = vmul.f32 %v1061, %v332
    %1066 = vrot.lane.b32.xlu0 %v1064, 96
    %v1067 = vpop.permute.xlu0 %1066
    %v1069 = vadd.f32 %v1058, %v1067
    %1070 = vset.pattern.permute.xlu0 2
    %1071 = vperm.xlu0 %1070, %v1049
    %v1072 = vpop.permute.xlu0 %1071
    %v1075 = vmul.f32 %v1072, %v435
    %1077 = vrot.lane.b32.xlu0 %v1075, 96
    %v1078 = vpop.permute.xlu0 %1077
    %v1080 = vadd.f32 %v1069, %v1078
    %1081 = vset.pattern.permute.xlu0 3
    %1082 = vperm.xlu0 %1081, %v1049
    %v1083 = vpop.permute.xlu0 %1082
    %v1086 = vmul.f32 %v1083, %v538
    %1088 = vrot.lane.b32.xlu0 %v1086, 96
    %v1089 = vpop.permute.xlu0 %1088
    %v1091 = vadd.f32 %v1080, %v1089
    %1092 = vset.pattern.permute.xlu0 4
    %1093 = vperm.xlu0 %1092, %v1049
    %v1094 = vpop.permute.xlu0 %1093
    %v1096 = vmul.f32 %v1094, %v634
    %v1097 = vadd.f32 %v1091, %v1096
    %1098 = vset.pattern.permute.xlu0 5
    %1099 = vperm.xlu0 %1098, %v1049
    %v1100 = vpop.permute.xlu0 %1099
    %v1103 = vmul.f32 %v1100, %v740
    %1105 = vrot.lane.b32.xlu0 %v1103, 96
    %v1106 = vpop.permute.xlu0 %1105
    %v1108 = vadd.f32 %v1097, %v1106
    %1109 = vset.pattern.permute.xlu0 6
    %1110 = vperm.xlu0 %1109, %v1049
    %v1111 = vpop.permute.xlu0 %1110
    %v1114 = vmul.f32 %v1111, %v843
    %1116 = vrot.lane.b32.xlu0 %v1114, 96
    %v1117 = vpop.permute.xlu0 %1116
    %v1119 = vadd.f32 %v1108, %v1117
    %1120 = vset.pattern.permute.xlu0 7
    %1121 = vperm.xlu0 %1120, %v1049
    %v1122 = vpop.permute.xlu0 %1121
    %v1125 = vrot.slane %v942, 6
    %1126 = vrot.lane.b32.xlu0 %v1125, 32
    %v1127 = vpop.permute.xlu0 %1126
    %v1129 = vmul.f32 %v1122, %v1127
    %1131 = vrot.lane.b32.xlu0 %v1129, 96
    %v1132 = vpop.permute.xlu0 %1131
    %v1134 = vadd.f32 %v1119, %v1132
    %v1135 = vlaneseq
    %v1136 = vshrl.u32 %v1135, 7
    %v1137 = vsub.s32 0, %v1136
    %v1138 = vrot.slane %v31, %v1137
    %1140 = vrot.lane.b32.xlu0 %v1138, 96
    %v1141 = vpop.permute.xlu0 %1140
    %v1143 = vmul.f32 %v1134, %v1141
    %1145 = vrot.lane.b32.xlu0 %v1143, 32
    %v1146 = vpop.permute.xlu0 %1145
    %v1148 = vsel %vm948, %v1146, 0.0
    %1149 = vadd.xlane.f32.xlu0 %v1148
    %v1150 = vpop.xlane.xlu0 %1149
    %v1151 = vrcp.pop %v1052
    %v1152 = vmul.f32 %v1150, %v1151
    %v1153 = vlaneseq
    %v1154 = vshrl.u32 %v1153, 7
    %v1155 = vsub.s32 0, %v1154
    %v1156 = vrot.slane %v32, %v1155
    %v1157 = vadd.f32 %v1152, %v1156
    %vm1158 = vcmask 1024
    %1159 = vst.msk [vmem:[%s2] sm:$0x3] %vm1158, %v1157
    // Predicated region
    $region14: #{_forward.1} parent=1 // pred_check
      _
    $region15: #{_forward.1} parent=1 // pred_check_branch
      %1161 = sbr.rel (0) target = $region17
    $region16: #{_forward.1} parent=1 // pred_region
      _
    $region17: #{_forward.1} parent=1 // pred_fallthru
      _
    // Predicated region
    $region18: #{_forward.1} parent=1 // pred_check
      _
    $region19: #{_forward.1} parent=1 // pred_check_branch
      %1163 = sbr.rel (0) target = $region21
    $region20: #{_forward.1} parent=1 // pred_region
      _
    $region21: #{_forward.1} parent=1 // pred_fallthru
      _
    %1164 = vsyncpa [#allocation3], 1

</llo_original>
